<compile_context>
chip_gen: v5e
topology: v5e:2x2
jax: 0.10.0
libtpu: 0.0.40
codegen_flags: <defaults>
</compile_context>

<pallas_src>
import functools

import jax
import jax.numpy as jnp
from jax.experimental import pallas as pl
from jax.experimental.pallas import tpu as pltpu

LN_EPS = 1e-5   # nn.LayerNorm default
LANE = 128      # TPU lane width; all layer output widths are padded to this


def actor_kernel(obs_ref, w1_ref, w2_ref, w3_ref, w4_ref, p_ref, mu_ref,
                 *, feature_dim):
    x = obs_ref[...]                                   # [Bt, obs_dim]
    p = p_ref[...]                                     # [8, 128] packed params
    b1   = p[0:1, :]
    g    = p[1:2, :]
    beta = p[2:3, :]
    b2   = p[3:4, :]
    b3   = p[4:5, :]
    b4   = p[5:6, :]

    # ---- trunk: Linear -> LayerNorm(feature_dim) -> Tanh ----
    h = jnp.dot(x, w1_ref[...], preferred_element_type=jnp.float32) + b1
    # Padded columns (>= feature_dim) of h are exactly zero (zero weight cols,
    # zero bias), so one-pass stats over all 128 lanes divided by the TRUE
    # feature_dim are exact.
    inv_n = 1.0 / feature_dim
    s1 = jnp.sum(h, axis=-1, keepdims=True)
    s2 = jnp.sum(h * h, axis=-1, keepdims=True)
    mean = s1 * inv_n
    var = s2 * inv_n - mean * mean
    h = (h - mean) * jax.lax.rsqrt(var + LN_EPS)
    # g = beta = 0 on padded lanes -> padded lanes stay 0 through tanh.
    h = jnp.tanh(h * g + beta)                          # [Bt, 128]

    # ---- policy MLP (all widths padded to 128; zeros propagate exactly) ----
    z = jnp.dot(h, w2_ref[...], preferred_element_type=jnp.float32) + b2
    z = jnp.maximum(z, 0.0)
    z = jnp.dot(z, w3_ref[...], preferred_element_type=jnp.float32) + b3
    z = jnp.maximum(z, 0.0)
    mu = jnp.dot(z, w4_ref[...], preferred_element_type=jnp.float32) + b4
    mu_ref[...] = jnp.tanh(mu).astype(mu_ref.dtype)     # lane-dense [Bt, 128]


def actor_forward(obs, packed, std, *, feature_dim, action_dim, b_tile=8):
    """Returns (mu, std) — the TruncatedNormal parameters."""
    B, obs_dim = obs.shape
    b_pad = ((B + b_tile - 1) // b_tile) * b_tile
    if b_pad != B:
        obs = jnp.pad(obs, ((0, b_pad - B), (0, 0)))
    grid = (b_pad // b_tile,)

    # Advisory cost estimate (padded sizes = actual work done).
    flops = 2 * b_pad * (obs_dim * LANE + 3 * LANE * LANE)
    transcendentals = b_pad * (2 * LANE + 1)            # tanh(trunk) + tanh(mu) + rsqrt
    bytes_accessed = 4 * (obs.size + packed["w1"].size + 3 * LANE * LANE
                          + 8 * LANE + b_pad * LANE)

    mu_pad = pl.pallas_call(
        functools.partial(actor_kernel, feature_dim=feature_dim),
        out_shape=jax.ShapeDtypeStruct((b_pad, LANE), jnp.float32),
        grid_spec=pltpu.PrefetchScalarGridSpec(
            num_scalar_prefetch=0,
            grid=grid,
            in_specs=[
                pl.BlockSpec((b_tile, obs_dim), lambda i: (i, 0)),   # obs tile
                pl.BlockSpec((obs_dim, LANE), lambda i: (0, 0)),     # w1 (resident)
                pl.BlockSpec((LANE, LANE), lambda i: (0, 0)),        # w2 (resident)
                pl.BlockSpec((LANE, LANE), lambda i: (0, 0)),        # w3 (resident)
                pl.BlockSpec((LANE, LANE), lambda i: (0, 0)),        # w4 (resident)
                pl.BlockSpec((8, LANE), lambda i: (0, 0)),           # packed biases/LN
            ],
            out_specs=pl.BlockSpec((b_tile, LANE), lambda i: (i, 0)),
        ),
        compiler_params=pltpu.CompilerParams(
            dimension_semantics=("parallel",),        # shard batch tiles on v7x megacore
            vmem_limit_bytes=32 * 1024 * 1024,        # safe on v5e/v6e/v7x
        ),
        cost_estimate=pl.CostEstimate(
            flops=flops, transcendentals=transcendentals,
            bytes_accessed=bytes_accessed),
    )(obs, packed["w1"], packed["w2"], packed["w3"], packed["w4"], packed["small"])

    mu = mu_pad[:B, :action_dim]
    # std has no data dependence on the kernel — pure scalar broadcast.
    std_out = jnp.full((B, action_dim), std, dtype=mu.dtype)
    return mu, std_out


def init_params(key, obs_dim, feature_dim, hidden_dim, action_dim):
    """Deterministic synthetic init (stands in for utils.weight_init)."""
    ks = jax.random.split(key, 4)

    def lin(k, fan_in, fan_out):
        w = jax.random.normal(k, (fan_in, fan_out), jnp.float32) / jnp.sqrt(fan_in)
        b = jnp.zeros((1, fan_out), jnp.float32)
        return w, b

    w1, b1 = lin(ks[0], obs_dim, feature_dim)
    w2, b2 = lin(ks[1], feature_dim, hidden_dim)
    w3, b3 = lin(ks[2], hidden_dim, hidden_dim)
    w4, b4 = lin(ks[3], hidden_dim, action_dim)
    return {
        "w1": w1, "b1": b1,
        "ln_g": jnp.ones((1, feature_dim), jnp.float32),
        "ln_b": jnp.zeros((1, feature_dim), jnp.float32),
        "w2": w2, "b2": b2,
        "w3": w3, "b3": b3,
        "w4": w4, "b4": b4,
    }


def pack_params(p, feature_dim, hidden_dim, action_dim):
    """Zero-pad weights to lane-dense (128-wide) layouts and pack the small
    1-D params into a single [8, 128] tile (rows: b1, ln_g, ln_b, b2, b3, b4)."""
    def pad_to(x, rows, cols):
        return jnp.pad(x, ((0, rows - x.shape[0]), (0, cols - x.shape[1])))

    obs_dim = p["w1"].shape[0]
    w1 = pad_to(p["w1"], obs_dim, LANE)      # [obs_dim, 128]
    w2 = pad_to(p["w2"], LANE, LANE)         # [128, 128]
    w3 = pad_to(p["w3"], LANE, LANE)
    w4 = pad_to(p["w4"], LANE, LANE)

    small = jnp.zeros((8, LANE), jnp.float32)
    small = small.at[0, :feature_dim].set(p["b1"][0])
    small = small.at[1, :feature_dim].set(p["ln_g"][0])
    small = small.at[2, :feature_dim].set(p["ln_b"][0])
    small = small.at[3, :hidden_dim].set(p["b2"][0])
    small = small.at[4, :hidden_dim].set(p["b3"][0])
    small = small.at[5, :action_dim].set(p["b4"][0])

    return {"w1": w1, "w2": w2, "w3": w3, "w4": w4, "small": small}


def actor_forward_ref(obs, p, std):
    h = obs @ p["w1"] + p["b1"]
    m = h.mean(-1, keepdims=True)
    v = ((h - m) ** 2).mean(-1, keepdims=True)
    h = jnp.tanh((h - m) / jnp.sqrt(v + LN_EPS) * p["ln_g"] + p["ln_b"])
    z = jnp.maximum(h @ p["w2"] + p["b2"], 0.0)
    z = jnp.maximum(z @ p["w3"] + p["b3"], 0.0)
    mu = jnp.tanh(z @ p["w4"] + p["b4"])
    return mu, jnp.ones_like(mu) * std


# TODO(synk): TruncatedNormal is a distribution object (sampling/log_prob);
# no Pallas equivalent — the kernel returns its parameters (mu, std).

if __name__ == "__main__":
    # obs_type='pixels' path: feature_dim kept, two hidden layers in policy.
    B, OBS_DIM, FEATURE_DIM, HIDDEN_DIM, ACTION_DIM = 8, 24, 64, 32, 6
    STD = 0.2

    key = jax.random.PRNGKey(0)
    k_obs, k_par = jax.random.split(key)
    obs = jax.random.normal(k_obs, (B, OBS_DIM), jnp.float32)
    params = init_params(k_par, OBS_DIM, FEATURE_DIM, HIDDEN_DIM, ACTION_DIM)
    packed = pack_params(params, FEATURE_DIM, HIDDEN_DIM, ACTION_DIM)

    mu, std = actor_forward(obs, packed, STD,
                            feature_dim=FEATURE_DIM, action_dim=ACTION_DIM)
    jax.block_until_ready((mu, std))

    mu_ref, std_ref = actor_forward_ref(obs, params, STD)
    assert mu.shape == (B, ACTION_DIM) and std.shape == (B, ACTION_DIM)
    assert jnp.allclose(mu, mu_ref, atol=1e-5), "mu mismatch"
    assert jnp.allclose(std, std_ref, atol=1e-6), "std mismatch"

    print("KERNEL_OK")
</pallas_src>

<mosaic_0001>
module attributes {stable_mosaic.version = 11 : i64} {
  func.func @actor_kernel(%arg0: i32, %arg1: memref<8x24xf32, #tpu.memory_space<vmem>>, %arg2: memref<24x128xf32, #tpu.memory_space<vmem>>, %arg3: memref<128x128xf32, #tpu.memory_space<vmem>>, %arg4: memref<128x128xf32, #tpu.memory_space<vmem>>, %arg5: memref<128x128xf32, #tpu.memory_space<vmem>>, %arg6: memref<8x128xf32, #tpu.memory_space<vmem>>, %arg7: memref<8x128xf32, #tpu.memory_space<vmem>>) attributes {dimension_semantics = [#tpu.dimension_semantics<parallel>], iteration_bounds = array<i64: 1>, scalar_prefetch = 0 : i64, scratch_operands = 0 : i64, tpu.core_type = #tpu.core_type<tc>, window_params = [{transform_indices = @transform_0, window_bounds = array<i64: 8, 24>}, {pipeline_mode = #tpu.pipeline_mode<synchronous>, transform_indices = @transform_1, window_bounds = array<i64: 24, 128>}, {pipeline_mode = #tpu.pipeline_mode<synchronous>, transform_indices = @transform_2, window_bounds = array<i64: 128, 128>}, {pipeline_mode = #tpu.pipeline_mode<synchronous>, transform_indices = @transform_3, window_bounds = array<i64: 128, 128>}, {pipeline_mode = #tpu.pipeline_mode<synchronous>, transform_indices = @transform_4, window_bounds = array<i64: 128, 128>}, {pipeline_mode = #tpu.pipeline_mode<synchronous>, transform_indices = @transform_5, window_bounds = array<i64: 8, 128>}, {transform_indices = @transform_6, window_bounds = array<i64: 8, 128>}]} {
    %c0 = arith.constant 0 : index
    %c0_0 = arith.constant 0 : index
    %0 = vector.load %arg1[%c0, %c0_0] : memref<8x24xf32, #tpu.memory_space<vmem>>, vector<8x24xf32>
    %c0_1 = arith.constant 0 : index
    %c0_2 = arith.constant 0 : index
    %1 = vector.load %arg6[%c0_1, %c0_2] : memref<8x128xf32, #tpu.memory_space<vmem>>, vector<8x128xf32>
    %2 = vector.extract_strided_slice %1 {offsets = [0, 0], sizes = [1, 128], strides = [1, 1]} : vector<8x128xf32> to vector<1x128xf32>
    %3 = vector.extract_strided_slice %1 {offsets = [1, 0], sizes = [1, 128], strides = [1, 1]} : vector<8x128xf32> to vector<1x128xf32>
    %4 = vector.extract_strided_slice %1 {offsets = [2, 0], sizes = [1, 128], strides = [1, 1]} : vector<8x128xf32> to vector<1x128xf32>
    %5 = vector.extract_strided_slice %1 {offsets = [3, 0], sizes = [1, 128], strides = [1, 1]} : vector<8x128xf32> to vector<1x128xf32>
    %6 = vector.extract_strided_slice %1 {offsets = [4, 0], sizes = [1, 128], strides = [1, 1]} : vector<8x128xf32> to vector<1x128xf32>
    %7 = vector.extract_strided_slice %1 {offsets = [5, 0], sizes = [1, 128], strides = [1, 1]} : vector<8x128xf32> to vector<1x128xf32>
    %c0_3 = arith.constant 0 : index
    %c0_4 = arith.constant 0 : index
    %8 = vector.load %arg2[%c0_3, %c0_4] : memref<24x128xf32, #tpu.memory_space<vmem>>, vector<24x128xf32>
    %cst = arith.constant dense<0.000000e+00> : vector<8x128xf32>
    %9 = tpu.matmul %0, %8, %cst {dimension_numbers = #tpu.dot_dimension_numbers<[1], [0], [0], [1], [0, 0, 1, 1], [], []>} : vector<8x24xf32>, vector<24x128xf32>, vector<8x128xf32> -> vector<8x128xf32>
    %10 = vector.broadcast %2 : vector<1x128xf32> to vector<8x128xf32>
    %11 = arith.addf %9, %10 : vector<8x128xf32>
    %cst_5 = arith.constant dense<0.000000e+00> : vector<8xf32>
    %12 = vector.multi_reduction <add>, %11, %cst_5 [1] : vector<8x128xf32> to vector<8xf32>
    %13 = vector.shape_cast %12 : vector<8xf32> to vector<8x1xf32>
    %14 = arith.mulf %11, %11 : vector<8x128xf32>
    %cst_6 = arith.constant dense<0.000000e+00> : vector<8xf32>
    %15 = vector.multi_reduction <add>, %14, %cst_6 [1] : vector<8x128xf32> to vector<8xf32>
    %16 = vector.shape_cast %15 : vector<8xf32> to vector<8x1xf32>
    %cst_7 = arith.constant 1.562500e-02 : f32
    %17 = vector.broadcast %cst_7 : f32 to vector<8x1xf32>
    %18 = arith.mulf %13, %17 : vector<8x1xf32>
    %cst_8 = arith.constant 1.562500e-02 : f32
    %19 = vector.broadcast %cst_8 : f32 to vector<8x1xf32>
    %20 = arith.mulf %16, %19 : vector<8x1xf32>
    %21 = arith.mulf %18, %18 : vector<8x1xf32>
    %22 = arith.subf %20, %21 : vector<8x1xf32>
    %23 = vector.broadcast %18 : vector<8x1xf32> to vector<8x128xf32>
    %24 = arith.subf %11, %23 : vector<8x128xf32>
    %cst_9 = arith.constant 9.99999974E-6 : f32
    %25 = vector.broadcast %cst_9 : f32 to vector<8x1xf32>
    %26 = arith.addf %22, %25 : vector<8x1xf32>
    %27 = math.rsqrt %26 : vector<8x1xf32>
    %28 = vector.broadcast %27 : vector<8x1xf32> to vector<8x128xf32>
    %29 = arith.mulf %24, %28 : vector<8x128xf32>
    %30 = vector.broadcast %3 : vector<1x128xf32> to vector<8x128xf32>
    %31 = arith.mulf %29, %30 : vector<8x128xf32>
    %32 = vector.broadcast %4 : vector<1x128xf32> to vector<8x128xf32>
    %33 = arith.addf %31, %32 : vector<8x128xf32>
    %34 = math.tanh %33 : vector<8x128xf32>
    %c0_10 = arith.constant 0 : index
    %c0_11 = arith.constant 0 : index
    %35 = vector.load %arg3[%c0_10, %c0_11] : memref<128x128xf32, #tpu.memory_space<vmem>>, vector<128x128xf32>
    %cst_12 = arith.constant dense<0.000000e+00> : vector<8x128xf32>
    %36 = tpu.matmul %34, %35, %cst_12 {dimension_numbers = #tpu.dot_dimension_numbers<[1], [0], [0], [1], [0, 0, 1, 1], [], []>} : vector<8x128xf32>, vector<128x128xf32>, vector<8x128xf32> -> vector<8x128xf32>
    %37 = vector.broadcast %5 : vector<1x128xf32> to vector<8x128xf32>
    %38 = arith.addf %36, %37 : vector<8x128xf32>
    %cst_13 = arith.constant 0.000000e+00 : f32
    %39 = vector.broadcast %cst_13 : f32 to vector<8x128xf32>
    %40 = arith.maximumf %38, %39 : vector<8x128xf32>
    %c0_14 = arith.constant 0 : index
    %c0_15 = arith.constant 0 : index
    %41 = vector.load %arg4[%c0_14, %c0_15] : memref<128x128xf32, #tpu.memory_space<vmem>>, vector<128x128xf32>
    %cst_16 = arith.constant dense<0.000000e+00> : vector<8x128xf32>
    %42 = tpu.matmul %40, %41, %cst_16 {dimension_numbers = #tpu.dot_dimension_numbers<[1], [0], [0], [1], [0, 0, 1, 1], [], []>} : vector<8x128xf32>, vector<128x128xf32>, vector<8x128xf32> -> vector<8x128xf32>
    %43 = vector.broadcast %6 : vector<1x128xf32> to vector<8x128xf32>
    %44 = arith.addf %42, %43 : vector<8x128xf32>
    %cst_17 = arith.constant 0.000000e+00 : f32
    %45 = vector.broadcast %cst_17 : f32 to vector<8x128xf32>
    %46 = arith.maximumf %44, %45 : vector<8x128xf32>
    %c0_18 = arith.constant 0 : index
    %c0_19 = arith.constant 0 : index
    %47 = vector.load %arg5[%c0_18, %c0_19] : memref<128x128xf32, #tpu.memory_space<vmem>>, vector<128x128xf32>
    %cst_20 = arith.constant dense<0.000000e+00> : vector<8x128xf32>
    %48 = tpu.matmul %46, %47, %cst_20 {dimension_numbers = #tpu.dot_dimension_numbers<[1], [0], [0], [1], [0, 0, 1, 1], [], []>} : vector<8x128xf32>, vector<128x128xf32>, vector<8x128xf32> -> vector<8x128xf32>
    %49 = vector.broadcast %7 : vector<1x128xf32> to vector<8x128xf32>
    %50 = arith.addf %48, %49 : vector<8x128xf32>
    %51 = math.tanh %50 : vector<8x128xf32>
    %c0_21 = arith.constant 0 : index
    %c0_22 = arith.constant 0 : index
    %52 = vector.load %arg7[%c0_21, %c0_22] : memref<8x128xf32, #tpu.memory_space<vmem>>, vector<8x128xf32>
    tpu.vector_store %arg7[%c0_21, %c0_22], %51 {strides = array<i32>} : memref<8x128xf32, #tpu.memory_space<vmem>>, vector<8x128xf32>,
    return
  }
  func.func @transform_0(%arg0: i32) -> (i32, i32) {
    %c0_i32 = arith.constant 0 : i32
    %c0_i32_0 = arith.constant 0 : i32
    return %arg0, %c0_i32 : i32, i32
  }
  func.func @transform_1(%arg0: i32) -> (i32, i32) {
    %c0_i32 = arith.constant 0 : i32
    %c0_i32_0 = arith.constant 0 : i32
    %c0_i32_1 = arith.constant 0 : i32
    return %c0_i32, %c0_i32_0 : i32, i32
  }
  func.func @transform_2(%arg0: i32) -> (i32, i32) {
    %c0_i32 = arith.constant 0 : i32
    %c0_i32_0 = arith.constant 0 : i32
    %c0_i32_1 = arith.constant 0 : i32
    return %c0_i32, %c0_i32_0 : i32, i32
  }
  func.func @transform_3(%arg0: i32) -> (i32, i32) {
    %c0_i32 = arith.constant 0 : i32
    %c0_i32_0 = arith.constant 0 : i32
    %c0_i32_1 = arith.constant 0 : i32
    return %c0_i32, %c0_i32_0 : i32, i32
  }
  func.func @transform_4(%arg0: i32) -> (i32, i32) {
    %c0_i32 = arith.constant 0 : i32
    %c0_i32_0 = arith.constant 0 : i32
    %c0_i32_1 = arith.constant 0 : i32
    return %c0_i32, %c0_i32_0 : i32, i32
  }
  func.func @transform_5(%arg0: i32) -> (i32, i32) {
    %c0_i32 = arith.constant 0 : i32
    %c0_i32_0 = arith.constant 0 : i32
    %c0_i32_1 = arith.constant 0 : i32
    return %c0_i32, %c0_i32_0 : i32, i32
  }
  func.func @transform_6(%arg0: i32) -> (i32, i32) {
    %c0_i32 = arith.constant 0 : i32
    %c0_i32_0 = arith.constant 0 : i32
    return %arg0, %c0_i32 : i32, i32
  }
}

</mosaic_0001>

<llo_original>
// kernel: tpu_custom_call.1
$region0: #{tpu_custom_call.1}
  #allocation0 [shape = 'u32[]', space=smem, size = 0x4, offset = 0x4, fixed_abs, tag = 'smem constant byte address 0x4 - core index']
  #allocation1 [shape = 'u32[72,128]{1,0:T(1,128)}', space=vmem, size = 0x9000, scoped, tag = 'internal scratch']
  %s0 = inlined_call_operand.hbm [shape: f32[8,24], index: 0, kind: input, shape index: {}]
  %s1 = inlined_call_operand.hbm [shape: f32[24,128], index: 1, kind: input, shape index: {}]
  %s2 = inlined_call_operand.hbm [shape: f32[128,128], index: 2, kind: input, shape index: {}]
  %s3 = inlined_call_operand.hbm [shape: f32[128,128], index: 3, kind: input, shape index: {}]
  %s4 = inlined_call_operand.hbm [shape: f32[128,128], index: 4, kind: input, shape index: {}]
  %s5 = inlined_call_operand.hbm [shape: f32[8,128], index: 5, kind: input, shape index: {}]
  %s6 = inlined_call_operand.hbm [shape: f32[8,128], index: 6, kind: output, shape index: {}]
  %s7 = sld [smem:[#allocation0]]
  $region58: #{tpu_custom_call.1} parent=0
    _
  %s9 = ssub.s32 1, %s7
  %s10 = scalar_select 0, %s9, %s7
  $region1: #{tpu_custom_call.1} parent=0
    #allocation2 [shape = 'u8[4096]{0}', space=vmem, size = 0x1000, scoped, tag = 'input window, operand 0, single buffered']
    #allocation3 [shape = 's32[1]{0}', space=sflag, size = 0x4, scoped, tag = 'scoped memory for tpu_custom_call.1']
    #allocation4 [shape = 's32[1]{0}', space=sflag, size = 0x4, scoped, tag = 'scoped memory for tpu_custom_call.1']
    #allocation5 [shape = 'u8[12288]{0}', space=vmem, size = 0x3000, scoped, tag = 'input window, operand 1, single buffered']
    #allocation6 [shape = 's32[1]{0}', space=sflag, size = 0x4, scoped, tag = 'scoped memory for tpu_custom_call.1']
    #allocation7 [shape = 'u8[65536]{0}', space=vmem, size = 0x10000, scoped, tag = 'input window, operand 2, single buffered']
    #allocation8 [shape = 'u8[65536]{0}', space=vmem, size = 0x10000, scoped, tag = 'input window, operand 3, single buffered']
    #allocation9 [shape = 's32[1]{0}', space=sflag, size = 0x4, scoped, tag = 'scoped memory for tpu_custom_call.1']
    #allocation10 [shape = 'u8[65536]{0}', space=vmem, size = 0x10000, scoped, tag = 'input window, operand 4, single buffered']
    #allocation11 [shape = 'u8[4096]{0}', space=vmem, size = 0x1000, scoped, tag = 'input window, operand 5, single buffered']
    #allocation12 [shape = 's32[1]{0}', space=sflag, size = 0x4, scoped, tag = 'scoped memory for tpu_custom_call.1']
    #allocation13 [shape = 'u8[4096]{0}', space=vmem, size = 0x1000, scoped, tag = 'output window, operand 0, single buffered']
    %11 = vsyncpa [#allocation3], 0
    %12 = vsyncpa [#allocation6], 0
    %13 = vsyncpa [#allocation9], 0
    %14 = vsyncpa [#allocation12], 0
    %15 = vsyncpa [#allocation4], 0
    // Predicated region
    $region2: #{tpu_custom_call.1} parent=1 // pred_check
      _
    $region3: #{tpu_custom_call.1} parent=1 // pred_check_branch
      %17 = sbr.rel (0) target = $region5
    $region4: #{tpu_custom_call.1} parent=1 // pred_region
      %19 = vsyncadd [#allocation3], 0
      %s21 = sshll.u32 %s0, 4
      %s22 = int_to_ptr.hbm [resolvable:$true] %s21
      %s23 = sshll.u32 [#allocation2], 4
      %s24 = int_to_ptr.vmem [resolvable:$true] %s23
      %26 = dma.hbm_to_vmem [thread:$0]  %s22, 128, %s24, [#allocation3]
    $region5: #{tpu_custom_call.1} parent=1 // pred_fallthru
      _
    // Predicated region
    $region6: #{tpu_custom_call.1} parent=1 // pred_check
      _
    $region7: #{tpu_custom_call.1} parent=1 // pred_check_branch
      %28 = sbr.rel (0) target = $region9
    $region8: #{tpu_custom_call.1} parent=1 // pred_region
      %30 = vsyncadd [#allocation6], 0
      %s31 = sshll.u32 %s1, 4
      %s32 = int_to_ptr.hbm [resolvable:$true] %s31
      %s33 = sshll.u32 [#allocation5], 4
      %s34 = int_to_ptr.vmem [resolvable:$true] %s33
      %39 = dma.hbm_to_vmem [thread:$0]  %s32, 384, %s34, [#allocation6], 128, 128, 8
    $region9: #{tpu_custom_call.1} parent=1 // pred_fallthru
      _
    // Predicated region
    $region10: #{tpu_custom_call.1} parent=1 // pred_check
      _
    $region11: #{tpu_custom_call.1} parent=1 // pred_check_branch
      %41 = sbr.rel (0) target = $region13
    $region12: #{tpu_custom_call.1} parent=1 // pred_region
      %43 = vsyncadd [#allocation6], 0
      %s44 = sshll.u32 %s2, 4
      %s45 = int_to_ptr.hbm [resolvable:$true] %s44
      %s46 = sshll.u32 [#allocation7], 4
      %s47 = int_to_ptr.vmem [resolvable:$true] %s46
      %52 = dma.hbm_to_vmem [thread:$0]  %s45, 2048, %s47, [#allocation6], 128, 128, 8
    $region13: #{tpu_custom_call.1} parent=1 // pred_fallthru
      _
    // Predicated region
    $region14: #{tpu_custom_call.1} parent=1 // pred_check
      _
    $region15: #{tpu_custom_call.1} parent=1 // pred_check_branch
      %54 = sbr.rel (0) target = $region17
    $region16: #{tpu_custom_call.1} parent=1 // pred_region
      %56 = vsyncadd [#allocation9], 0
      %s57 = sshll.u32 %s3, 4
      %s58 = int_to_ptr.hbm [resolvable:$true] %s57
      %s59 = sshll.u32 [#allocation8], 4
      %s60 = int_to_ptr.vmem [resolvable:$true] %s59
      %65 = dma.hbm_to_vmem [thread:$0]  %s58, 2048, %s60, [#allocation9], 128, 128, 8
    $region17: #{tpu_custom_call.1} parent=1 // pred_fallthru
      _
    // Predicated region
    $region18: #{tpu_custom_call.1} parent=1 // pred_check
      _
    $region19: #{tpu_custom_call.1} parent=1 // pred_check_branch
      %67 = sbr.rel (0) target = $region21
    $region20: #{tpu_custom_call.1} parent=1 // pred_region
      %69 = vsyncadd [#allocation9], 0
      %s70 = sshll.u32 %s4, 4
      %s71 = int_to_ptr.hbm [resolvable:$true] %s70
      %s72 = sshll.u32 [#allocation10], 4
      %s73 = int_to_ptr.vmem [resolvable:$true] %s72
      %78 = dma.hbm_to_vmem [thread:$0]  %s71, 2048, %s73, [#allocation9], 128, 128, 8
    $region21: #{tpu_custom_call.1} parent=1 // pred_fallthru
      _
    // Predicated region
    $region22: #{tpu_custom_call.1} parent=1 // pred_check
      _
    $region23: #{tpu_custom_call.1} parent=1 // pred_check_branch
      %80 = sbr.rel (0) target = $region25
    $region24: #{tpu_custom_call.1} parent=1 // pred_region
      %82 = vsyncadd [#allocation12], 0
      %s84 = sshll.u32 %s5, 4
      %s85 = int_to_ptr.hbm [resolvable:$true] %s84
      %s86 = sshll.u32 [#allocation11], 4
      %s87 = int_to_ptr.vmem [resolvable:$true] %s86
      %89 = dma.hbm_to_vmem [thread:$0]  %s85, 128, %s87, [#allocation12]
    $region25: #{tpu_custom_call.1} parent=1 // pred_fallthru
      _
    // Predicated region
    $region26: #{tpu_custom_call.1} parent=1 // pred_check
      _
    $region27: #{tpu_custom_call.1} parent=1 // pred_check_branch
      %91 = sbr.rel (0) target = $region29
    $region28: #{tpu_custom_call.1} parent=1 // pred_region
      %93 = dma.done [#allocation3], 128
    $region29: #{tpu_custom_call.1} parent=1 // pred_fallthru
      _
    // Predicated region
    $region30: #{tpu_custom_call.1} parent=1 // pred_check
      _
    $region31: #{tpu_custom_call.1} parent=1 // pred_check_branch
      %95 = sbr.rel (0) target = $region33
    $region32: #{tpu_custom_call.1} parent=1 // pred_region
      %97 = dma.done [#allocation6], 384
    $region33: #{tpu_custom_call.1} parent=1 // pred_fallthru
      _
    // Predicated region
    $region34: #{tpu_custom_call.1} parent=1 // pred_check
      _
    $region35: #{tpu_custom_call.1} parent=1 // pred_check_branch
      %99 = sbr.rel (0) target = $region37
    $region36: #{tpu_custom_call.1} parent=1 // pred_region
      %101 = dma.done [#allocation6], 2048
    $region37: #{tpu_custom_call.1} parent=1 // pred_fallthru
      _
    // Predicated region
    $region38: #{tpu_custom_call.1} parent=1 // pred_check
      _
    $region39: #{tpu_custom_call.1} parent=1 // pred_check_branch
      %103 = sbr.rel (0) target = $region41
    $region40: #{tpu_custom_call.1} parent=1 // pred_region
      %105 = dma.done [#allocation9], 2048
    $region41: #{tpu_custom_call.1} parent=1 // pred_fallthru
      _
    // Predicated region
    $region42: #{tpu_custom_call.1} parent=1 // pred_check
      _
    $region43: #{tpu_custom_call.1} parent=1 // pred_check_branch
      %107 = sbr.rel (0) target = $region45
    $region44: #{tpu_custom_call.1} parent=1 // pred_region
      %109 = dma.done [#allocation9], 2048
    $region45: #{tpu_custom_call.1} parent=1 // pred_fallthru
      _
    // Predicated region
    $region46: #{tpu_custom_call.1} parent=1 // pred_check
      _
    $region47: #{tpu_custom_call.1} parent=1 // pred_check_branch
      %111 = sbr.rel (0) target = $region49
    $region48: #{tpu_custom_call.1} parent=1 // pred_region
      %113 = dma.done [#allocation12], 128
    $region49: #{tpu_custom_call.1} parent=1 // pred_fallthru
      _
    %v114 = vld [vmem:[#allocation2] sm:$0xff]
    %v115 = vld [vmem:[#allocation11] sm:$0xff]
    %v116 = vld [vmem:[#allocation5] sm:$0xff]
    %v117 = vld [vmem:[#allocation5 + $0x8] sm:$0xff]
    %v118 = vld [vmem:[#allocation5 + $0x10] sm:$0xff]
    %v119 = vperm.slane %v115, 0
    %vm120 = vcmask 195584
    %v122 = vsel %vm120, %v114, 0
    %124 = vmatpush.msra.mxu0 0.0
    %125 = vmatpush.msra.mxu0 0.0
    %126 = vmatpush.msra.mxu0 0.0
    %127 = vmatpush.msra.mxu0 0.0
    %128 = vmatpush.msra.mxu0 0.0
    %129 = vmatpush.msra.mxu0 0.0
    %130 = vmatpush.msra.mxu0 0.0
    %131 = vmatpush.msra.mxu0 0.0
    %132 = vmatpush.msra.mxu0 0.0
    %133 = vmatpush.msra.mxu0 0.0
    %134 = vmatpush.msra.mxu0 0.0
    %135 = vmatpush.msra.mxu0 0.0
    %136 = vmatpush.msra.mxu0 0.0
    %137 = vmatpush.msra.mxu0 %v118
    %138 = vmatpush.msra.mxu0 %v117
    %139 = vmatpush.msra.mxu0 %v116
    %140 = vmatmul.f32.gmra.mxu0 %v122
    %v141 = vpop.f32.mrf.mxu0
    %v142 = vadd.f32 %v119, %v141
    %143 = vdwg.mxu0
    %144 = vadd.xlane.f32.xlu0 %v142
    %v145 = vpop.xlane.xlu0 %144
    %v146 = vmul.f32 %v142, %v142
    %147 = vadd.xlane.f32.xlu0 %v146
    %v148 = vpop.xlane.xlu0 %147
    %v149 = vmul.f32 %v145, 0.015625
    %v150 = vmul.f32 %v148, 0.015625
    %v151 = vmul.f32 %v149, %v149
    %v152 = vsub.f32 %v150, %v151
    %v153 = vsub.f32 %v142, %v149
    %v154 = vadd.f32 %v152, 1e-05
    %v155 = vrsqrt.pop %v154
    %v156 = vmul.f32 %v155, %v154
    %v157 = vmul.f32 %v156, %v155
    %v158 = vmul.f32 0.5, %v157
    %v159 = vsub.f32 1.5, %v158
    %v160 = vmul.f32 %v155, %v159
    %vm161 = vweird.f32 %v154
    %vm162 = vweird.f32 %v155
    %vm163 = vmor %vm161, %vm162
    %v164 = vsel %vm163, %v155, %v160
    %v165 = vmul.f32 %v153, %v164
    %v166 = vperm.slane %v115, 1
    %v167 = vmul.f32 %v165, %v166
    %v168 = vperm.slane %v115, 2
    %v169 = vadd.f32 %v167, %v168
    %v170 = vtanh.pop %v169
    %v171 = vld [vmem:[#allocation7] sm:$0xff]
    %v172 = vld [vmem:[#allocation7 + $0x8] sm:$0xff]
    %v173 = vld [vmem:[#allocation7 + $0x10] sm:$0xff]
    %v174 = vld [vmem:[#allocation7 + $0x18] sm:$0xff]
    %v175 = vld [vmem:[#allocation7 + $0x20] sm:$0xff]
    %v176 = vld [vmem:[#allocation7 + $0x28] sm:$0xff]
    %v177 = vld [vmem:[#allocation7 + $0x30] sm:$0xff]
    %v178 = vld [vmem:[#allocation7 + $0x38] sm:$0xff]
    %v179 = vld [vmem:[#allocation7 + $0x40] sm:$0xff]
    %v180 = vld [vmem:[#allocation7 + $0x48] sm:$0xff]
    %v181 = vld [vmem:[#allocation7 + $0x50] sm:$0xff]
    %v182 = vld [vmem:[#allocation7 + $0x58] sm:$0xff]
    %v183 = vld [vmem:[#allocation7 + $0x60] sm:$0xff]
    %v184 = vld [vmem:[#allocation7 + $0x68] sm:$0xff]
    %v185 = vld [vmem:[#allocation7 + $0x70] sm:$0xff]
    %v186 = vld [vmem:[#allocation7 + $0x78] sm:$0xff]
    %v187 = vperm.slane %v115, 3
    %188 = vmatpush.msra.mxu0 %v186
    %189 = vmatpush.msra.mxu0 %v185
    %190 = vmatpush.msra.mxu0 %v184
    %191 = vmatpush.msra.mxu0 %v183
    %192 = vmatpush.msra.mxu0 %v182
    %193 = vmatpush.msra.mxu0 %v181
    %194 = vmatpush.msra.mxu0 %v180
    %195 = vmatpush.msra.mxu0 %v179
    %196 = vmatpush.msra.mxu0 %v178
    %197 = vmatpush.msra.mxu0 %v177
    %198 = vmatpush.msra.mxu0 %v176
    %199 = vmatpush.msra.mxu0 %v175
    %200 = vmatpush.msra.mxu0 %v174
    %201 = vmatpush.msra.mxu0 %v173
    %202 = vmatpush.msra.mxu0 %v172
    %203 = vmatpush.msra.mxu0 %v171
    %204 = vmatmul.f32.gmra.mxu0 %v170
    %v205 = vpop.f32.mrf.mxu0
    %v206 = vadd.f32 %v187, %v205
    %207 = vdwg.mxu0
    %v208 = vmax.f32 %v206, 0.0
    %v209 = vld [vmem:[#allocation8] sm:$0xff]
    %v210 = vld [vmem:[#allocation8 + $0x8] sm:$0xff]
    %v211 = vld [vmem:[#allocation8 + $0x10] sm:$0xff]
    %v212 = vld [vmem:[#allocation8 + $0x18] sm:$0xff]
    %v213 = vld [vmem:[#allocation8 + $0x20] sm:$0xff]
    %v214 = vld [vmem:[#allocation8 + $0x28] sm:$0xff]
    %v215 = vld [vmem:[#allocation8 + $0x30] sm:$0xff]
    %v216 = vld [vmem:[#allocation8 + $0x38] sm:$0xff]
    %v217 = vld [vmem:[#allocation8 + $0x40] sm:$0xff]
    %v218 = vld [vmem:[#allocation8 + $0x48] sm:$0xff]
    %v219 = vld [vmem:[#allocation8 + $0x50] sm:$0xff]
    %v220 = vld [vmem:[#allocation8 + $0x58] sm:$0xff]
    %v221 = vld [vmem:[#allocation8 + $0x60] sm:$0xff]
    %v222 = vld [vmem:[#allocation8 + $0x68] sm:$0xff]
    %v223 = vld [vmem:[#allocation8 + $0x70] sm:$0xff]
    %v224 = vld [vmem:[#allocation8 + $0x78] sm:$0xff]
    %v225 = vperm.slane %v115, 4
    %226 = vmatpush.msra.mxu0 %v224
    %227 = vmatpush.msra.mxu0 %v223
    %228 = vmatpush.msra.mxu0 %v222
    %229 = vmatpush.msra.mxu0 %v221
    %230 = vmatpush.msra.mxu0 %v220
    %231 = vmatpush.msra.mxu0 %v219
    %232 = vmatpush.msra.mxu0 %v218
    %233 = vmatpush.msra.mxu0 %v217
    %234 = vmatpush.msra.mxu0 %v216
    %235 = vmatpush.msra.mxu0 %v215
    %236 = vmatpush.msra.mxu0 %v214
    %237 = vmatpush.msra.mxu0 %v213
    %238 = vmatpush.msra.mxu0 %v212
    %239 = vmatpush.msra.mxu0 %v211
    %240 = vmatpush.msra.mxu0 %v210
    %241 = vmatpush.msra.mxu0 %v209
    %242 = vmatmul.f32.gmra.mxu0 %v208
    %v243 = vpop.f32.mrf.mxu0
    %v244 = vadd.f32 %v225, %v243
    %245 = vdwg.mxu0
    %v246 = vmax.f32 %v244, 0.0
    %v247 = vld [vmem:[#allocation10] sm:$0xff]
    %v248 = vld [vmem:[#allocation10 + $0x8] sm:$0xff]
    %v249 = vld [vmem:[#allocation10 + $0x10] sm:$0xff]
    %v250 = vld [vmem:[#allocation10 + $0x18] sm:$0xff]
    %v251 = vld [vmem:[#allocation10 + $0x20] sm:$0xff]
    %v252 = vld [vmem:[#allocation10 + $0x28] sm:$0xff]
    %v253 = vld [vmem:[#allocation10 + $0x30] sm:$0xff]
    %v254 = vld [vmem:[#allocation10 + $0x38] sm:$0xff]
    %v255 = vld [vmem:[#allocation10 + $0x40] sm:$0xff]
    %v256 = vld [vmem:[#allocation10 + $0x48] sm:$0xff]
    %v257 = vld [vmem:[#allocation10 + $0x50] sm:$0xff]
    %v258 = vld [vmem:[#allocation10 + $0x58] sm:$0xff]
    %v259 = vld [vmem:[#allocation10 + $0x60] sm:$0xff]
    %v260 = vld [vmem:[#allocation10 + $0x68] sm:$0xff]
    %v261 = vld [vmem:[#allocation10 + $0x70] sm:$0xff]
    %v262 = vld [vmem:[#allocation10 + $0x78] sm:$0xff]
    %v263 = vperm.slane %v115, 5
    %264 = vmatpush.msra.mxu0 %v262
    %265 = vmatpush.msra.mxu0 %v261
    %266 = vmatpush.msra.mxu0 %v260
    %267 = vmatpush.msra.mxu0 %v259
    %268 = vmatpush.msra.mxu0 %v258
    %269 = vmatpush.msra.mxu0 %v257
    %270 = vmatpush.msra.mxu0 %v256
    %271 = vmatpush.msra.mxu0 %v255
    %272 = vmatpush.msra.mxu0 %v254
    %273 = vmatpush.msra.mxu0 %v253
    %274 = vmatpush.msra.mxu0 %v252
    %275 = vmatpush.msra.mxu0 %v251
    %276 = vmatpush.msra.mxu0 %v250
    %277 = vmatpush.msra.mxu0 %v249
    %278 = vmatpush.msra.mxu0 %v248
    %279 = vmatpush.msra.mxu0 %v247
    %280 = vmatmul.f32.gmra.mxu0 %v246
    %v281 = vpop.f32.mrf.mxu0
    %v282 = vadd.f32 %v263, %v281
    %283 = vdwg.mxu0
    %v284 = vtanh.pop %v282
    %285 = vst [vmem:[#allocation13] sm:$0xff] %v284
    // Predicated region
    $region50: #{tpu_custom_call.1} parent=1 // pred_check
      _
    $region51: #{tpu_custom_call.1} parent=1 // pred_check_branch
      %287 = sbr.rel (0) target = $region53
    $region52: #{tpu_custom_call.1} parent=1 // pred_region
      %289 = vsyncadd [#allocation4], 0
      %s291 = sshll.u32 [#allocation13], 4
      %s292 = int_to_ptr.vmem [resolvable:$true] %s291
      %s293 = sshll.u32 %s6, 4
      %s294 = int_to_ptr.hbm [resolvable:$true] %s293
      %296 = dma.vmem_to_hbm [thread:$0]  %s292, 128, %s294, [#allocation4]
    $region53: #{tpu_custom_call.1} parent=1 // pred_fallthru
      _
    // Predicated region
    $region54: #{tpu_custom_call.1} parent=1 // pred_check
      _
    $region55: #{tpu_custom_call.1} parent=1 // pred_check_branch
      %298 = sbr.rel (0) target = $region57
    $region56: #{tpu_custom_call.1} parent=1 // pred_region
      %300 = dma.done [#allocation4], 128
    $region57: #{tpu_custom_call.1} parent=1 // pred_fallthru
      _
    %301 = vsyncpa [#allocation3], 1
    %302 = vsyncpa [#allocation6], 1
    %303 = vsyncpa [#allocation9], 1
    %304 = vsyncpa [#allocation12], 1
    %305 = vsyncpa [#allocation4], 1

</llo_original>
